<compile_context>
chip_gen: v5e
topology: v5e:2x2
jax: 0.10.0
libtpu: 0.0.40
codegen_flags: <defaults>
</compile_context>

<pallas_src>
import functools

import numpy as np
import jax
import jax.numpy as jnp
from jax.experimental import pallas as pl
from jax.experimental.pallas import tpu as pltpu


_SUBROWS = 8   # original rows folded into one lane-dense slab row (8*J lanes)


def _round_up(x, m):
    return ((x + m - 1) // m) * m


def _budgets():
    """(combined per-step tile byte budget, scoped-VMEM limit), generation aware."""
    vmem_cap = 128 << 20
    try:  # v7x has 64 MiB/TC; v5e/v6e have 128 MiB.
        info = pltpu.get_tpu_info()
        vmem_cap = int(getattr(info, "vmem_capacity_bytes", vmem_cap))
    except Exception:
        pass
    tile_budget = (8 << 20) if vmem_cap >= (100 << 20) else (4 << 20)
    vmem_limit = min(40 << 20, max(16 << 20, vmem_cap // 2))
    return tile_budget, vmem_limit


# --------------------------------------------------------------------------
# Kernels — each grid step writes its own partial sum (no carried accumulator)
# --------------------------------------------------------------------------
def _bone_pos_kernel(d_ref, pos_ref, pred_ref, out_ref, *, tr, nr_valid,
                     need_mask):
    """sum((pred - ||child - parent||)^2) over one tile of lane-dense slabs."""
    i = pl.program_id(0)
    dmat = d_ref[...]                                   # (L, L), grid-invariant
    # Three coordinate planes, each (tr, L); gather+difference on the MXU.
    d0 = jnp.dot(pos_ref[0].astype(jnp.float32), dmat,
                 preferred_element_type=jnp.float32)
    d1 = jnp.dot(pos_ref[1].astype(jnp.float32), dmat,
                 preferred_element_type=jnp.float32)
    d2 = jnp.dot(pos_ref[2].astype(jnp.float32), dmat,
                 preferred_element_type=jnp.float32)
    sq = d0 * d0 + d1 * d1 + d2 * d2                    # VPU: 3 squared planes
    diff = pred_ref[...].astype(jnp.float32) - jnp.sqrt(sq)
    dd = diff * diff
    if need_mask:   # static: only when the last tile is ragged (garbage rows)
        row = jax.lax.broadcasted_iota(jnp.int32, dd.shape, 0) + i * tr
        dd = jnp.where(row < nr_valid, dd, 0.0)
    out_ref[...] = jnp.full(out_ref.shape, jnp.sum(dd), dtype=out_ref.dtype)


def _mse_2d_kernel(p_ref, t_ref, out_ref, *, tb, b_valid, need_mask):
    """Plain row-tiled sum of squared errors (canonical 2-D path)."""
    i = pl.program_id(0)
    d = p_ref[...].astype(jnp.float32) - t_ref[...].astype(jnp.float32)
    dd = d * d
    if need_mask:
        row = jax.lax.broadcasted_iota(jnp.int32, dd.shape, 0) + i * tb
        dd = jnp.where(row < b_valid, dd, 0.0)
    out_ref[...] = jnp.full(out_ref.shape, jnp.sum(dd), dtype=out_ref.dtype)


def _mse_bcast_kernel(p_ref, t_ref, out_ref, *, tb, ts, num_joints,
                      b_valid, s_valid, need_b_mask, need_s_mask):
    """Canonical 3-D path: target block (tb,1,8J) stays resident across S."""
    b = pl.program_id(0)
    s = pl.program_id(1)
    d = p_ref[...].astype(jnp.float32) - t_ref[...].astype(jnp.float32)
    dd = d * d                                           # (tb, ts, 8J)
    if need_b_mask or need_s_mask:                       # static flags
        valid = None
        if need_b_mask:
            bi = jax.lax.broadcasted_iota(jnp.int32, dd.shape, 0) + b * tb
            valid = bi < b_valid
        if need_s_mask:
            si = jax.lax.broadcasted_iota(jnp.int32, dd.shape, 1) + s * ts
            lane = jax.lax.broadcasted_iota(jnp.int32, dd.shape, 2)
            sub = si * _SUBROWS + lane // num_joints     # true sequence index
            m = sub < s_valid
            valid = m if valid is None else (valid & m)
        dd = jnp.where(valid, dd, 0.0)
    out_ref[...] = jnp.full(out_ref.shape, jnp.sum(dd), dtype=out_ref.dtype)


# --------------------------------------------------------------------------
# Module
# --------------------------------------------------------------------------
class BoneLengthMSELoss:
    """Pallas port of the PyTorch BoneLengthMSELoss module (forward only)."""

    def __init__(self, parents_list=None):
        if parents_list is not None:
            self.parents = np.array(parents_list)
            valid = self.parents[self.parents != -1]
            if not np.all(np.isin(valid, np.arange(len(self.parents)))):
                raise ValueError('Invalid parent indices found in parents_list.')
        else:
            self.parents = None
        self._dmats = {}   # J -> (8J, 8J) block-diag "I - parent-one-hot" matrix

    # ---- static gather matrix (built once per J) ---------------------------
    def _diff_matrix(self, J):
        D = self._dmats.get(J)
        if D is None:
            L = _SUBROWS * J
            Dm = np.zeros((L, L), np.float32)
            for k in range(_SUBROWS):
                base = k * J
                for j in range(J):
                    p = int(self.parents[j])
                    if p != -1:                 # root columns stay all-zero -> 0
                        Dm[base + j, base + j] += 1.0
                        Dm[base + p, base + j] -= 1.0
            D = jnp.asarray(Dm)
            self._dmats[J] = D
        return D

    # ---- positions -> bone-length MSE (hot path) ----------------------------
    def _loss_from_positions(self, pred, positions_3d):
        if self.parents is None:
            raise ValueError('parents_list must be provided to compute bone '
                             'lengths from 3D positions.')
        if positions_3d.ndim == 3:
            B, J, _ = positions_3d.shape
            N = B
        elif positions_3d.ndim == 4:
            B, S, J, _ = positions_3d.shape
            N = B * S
        else:
            raise ValueError(f'positions_3d has unsupported ndim: '
                             f'{positions_3d.ndim}. Expected 3 or 4.')
        if len(self.parents) != J:
            raise ValueError('parents_list length does not match num_joints.')
        if pred.shape != positions_3d.shape[:-1]:
            raise ValueError('Shape mismatch between predicted_bone_lengths '
                             'and target positions.')

        L = _SUBROWS * J
        D = self._diff_matrix(J)

        pos = positions_3d.reshape(N, 3 * J)   # free row-major reshape
        prd = pred.reshape(N, J)
        if N % _SUBROWS:                       # tiny pad (<8 rows); zeros add 0
            padr = _SUBROWS - (N % _SUBROWS)
            pos = jnp.pad(pos, ((0, padr), (0, 0)))
            prd = jnp.pad(prd, ((0, padr), (0, 0)))
        NR = pos.shape[0] // _SUBROWS
        # Coordinate-major planes (3, NR, 8J): one XLA transpose pass that buys
        # a 4x-smaller gather matmul and exactly-128-lane blocks for J=16.
        pos = pos.reshape(NR, _SUBROWS, J, 3).transpose(3, 0, 1, 2)
        pos = pos.reshape(3, NR, L)
        prd = prd.reshape(NR, L)               # free

        tile_budget, vmem_limit = _budgets()
        row_bytes = 4 * L * 4                  # 3 coord planes + pred, fp32 worst case
        cap = max(8, (tile_budget // row_bytes) // 8 * 8)
        tr = NR if NR <= cap else cap
        nt = pl.cdiv(NR, tr)
        need_mask = (NR % tr) != 0

        kernel = functools.partial(_bone_pos_kernel, tr=tr, nr_valid=NR,
                                   need_mask=need_mask)
        out = pl.pallas_call(
            kernel,
            out_shape=jax.ShapeDtypeStruct((nt, 8, 128), jnp.float32),
            grid=(nt,),
            in_specs=[
                pl.BlockSpec((L, L), lambda i: (0, 0)),         # D, VMEM-resident
                pl.BlockSpec((3, tr, L), lambda i: (0, i, 0)),  # coord planes
                pl.BlockSpec((tr, L), lambda i: (i, 0)),        # predictions
            ],
            out_specs=pl.BlockSpec((1, 8, 128), lambda i: (i, 0, 0)),
            compiler_params=pltpu.CompilerParams(
                dimension_semantics=("parallel",),
                vmem_limit_bytes=vmem_limit),
        )(D, pos, prd)
        return jnp.sum(out[:, 0, 0]) * (1.0 / float(N * J))

    # ---- canonical lengths, pred (B, J) --------------------------------------
    def _canon_loss_2d(self, pred, target):
        B, J = pred.shape
        tile_budget, vmem_limit = _budgets()
        row_bytes = 2 * max(J, 128) * 4        # lane dim pads to 128 in VMEM
        cap = max(8, (tile_budget // row_bytes) // 8 * 8)
        tb = B if B <= cap else cap
        nb = pl.cdiv(B, tb)
        need_mask = (B % tb) != 0

        kernel = functools.partial(_mse_2d_kernel, tb=tb, b_valid=B,
                                   need_mask=need_mask)
        out = pl.pallas_call(
            kernel,
            out_shape=jax.ShapeDtypeStruct((nb, 8, 128), jnp.float32),
            grid=(nb,),
            in_specs=[pl.BlockSpec((tb, J), lambda i: (i, 0)),
                      pl.BlockSpec((tb, J), lambda i: (i, 0))],
            out_specs=pl.BlockSpec((1, 8, 128), lambda i: (i, 0, 0)),
            compiler_params=pltpu.CompilerParams(
                dimension_semantics=("parallel",),
                vmem_limit_bytes=vmem_limit),
        )(pred, target)
        return jnp.sum(out[:, 0, 0]) * (1.0 / float(B * J))

    # ---- canonical lengths, pred (B, S, J): lane-dense, target VMEM-resident --
    def _canon_loss_3d(self, pred, target):
        B, S, J = pred.shape
        L = _SUBROWS * J

        prd = pred
        if S % _SUBROWS:                       # small pad; masked in-kernel
            prd = jnp.pad(prd, ((0, 0), (0, _SUBROWS - S % _SUBROWS), (0, 0)))
        Ssl = prd.shape[1] // _SUBROWS
        prd = prd.reshape(B, Ssl, L)           # free: lane-dense slabs
        # Tiny (B, 8J) broadcast of the canonical lengths, kept resident across S.
        tgt = jnp.tile(target, (1, _SUBROWS)).reshape(B, 1, L)

        tile_budget, vmem_limit = _budgets()
        lane_bytes = max(L, 128) * 4
        ts = Ssl if Ssl * lane_bytes <= tile_budget else \
            max(8, (tile_budget // lane_bytes) // 8 * 8)
        tb = max(1, min(B, tile_budget // (ts * lane_bytes)))
        nb, ns = pl.cdiv(B, tb), pl.cdiv(Ssl, ts)
        need_b = (B % tb) != 0
        need_s = (S % _SUBROWS != 0) or (Ssl % ts != 0)

        kernel = functools.partial(_mse_bcast_kernel, tb=tb, ts=ts,
                                   num_joints=J, b_valid=B, s_valid=S,
                                   need_b_mask=need_b, need_s_mask=need_s)
        out = pl.pallas_call(
            kernel,
            out_shape=jax.ShapeDtypeStruct((nb, ns, 8, 128), jnp.float32),
            grid=(nb, ns),
            in_specs=[pl.BlockSpec((tb, ts, L), lambda b, s: (b, s, 0)),
                      # canonical lengths: same block across s -> no HBM
                      # broadcast, stays resident in VMEM across the sequence.
                      pl.BlockSpec((tb, 1, L), lambda b, s: (b, 0, 0))],
            out_specs=pl.BlockSpec((1, 1, 8, 128), lambda b, s: (b, s, 0, 0)),
            compiler_params=pltpu.CompilerParams(
                dimension_semantics=("parallel", "arbitrary"),
                vmem_limit_bytes=vmem_limit),
        )(prd, tgt)
        return jnp.sum(out[:, :, 0, 0]) * (1.0 / float(B * S * J))

    # ---- forward -------------------------------------------------------------
    def __call__(self, predicted_bone_lengths, target_input,
                 target_is_canonical_lengths=False):
        pred = predicted_bone_lengths
        if target_is_canonical_lengths:
            tgt = target_input
            if tgt.ndim != 2:
                raise ValueError('If target_is_canonical_lengths=True, '
                                 'target_input must be (B, J).')
            if pred.shape[0] != tgt.shape[0] or pred.shape[-1] != tgt.shape[1]:
                raise ValueError('Shape mismatch (Batch or NumJoints) between '
                                 'predictions and canonical lengths.')
            if pred.ndim == 3:
                return self._canon_loss_3d(pred, tgt)
            if pred.ndim == 2:
                return self._canon_loss_2d(pred, tgt)
            raise ValueError('predicted_bone_lengths must be 2-D or 3-D.')
        return self._loss_from_positions(pred, target_input)


if __name__ == "__main__":
    key = jax.random.PRNGKey(0)
    B, S, J = 2, 8, 16
    # deterministic synthetic skeleton (16 joints)
    parents = [-1, 0, 1, 2, 0, 4, 5, 0, 7, 8, 9, 8, 11, 12, 8, 14]

    k1, k2, k3 = jax.random.split(key, 3)
    positions = jax.random.normal(k1, (B, S, J, 3), dtype=jnp.float32)
    pred = jax.random.uniform(k2, (B, S, J), dtype=jnp.float32)

    loss_fn = BoneLengthMSELoss(parents)

    # Pure-JAX reference pieces.
    safe = jnp.array([0 if p == -1 else p for p in parents])
    mask = jnp.array([0.0 if p == -1 else 1.0 for p in parents], jnp.float32)

    # Path 1: bone lengths computed from target 3-D positions inside the kernel.
    loss = jax.block_until_ready(loss_fn(pred, positions))
    bone = jnp.linalg.norm(positions - positions[:, :, safe, :], axis=-1) * mask
    ref = jnp.mean((pred - bone) ** 2)
    assert abs(float(loss) - float(ref)) < 1e-4 * max(1.0, abs(float(ref))), \
        (float(loss), float(ref))

    # Path 2a: canonical lengths vs sequential predictions (B, S, J).
    canon = jax.random.uniform(k3, (B, J), dtype=jnp.float32)
    loss2 = jax.block_until_ready(
        loss_fn(pred, canon, target_is_canonical_lengths=True))
    ref2 = jnp.mean((pred - canon[:, None, :]) ** 2)
    assert abs(float(loss2) - float(ref2)) < 1e-5, (float(loss2), float(ref2))

    # Path 2b: canonical lengths vs non-sequential predictions (B, J).
    pred2d = pred[:, 0, :]
    loss3 = jax.block_until_ready(
        loss_fn(pred2d, canon, target_is_canonical_lengths=True))
    ref3 = jnp.mean((pred2d - canon) ** 2)
    assert abs(float(loss3) - float(ref3)) < 1e-5, (float(loss3), float(ref3))

    # Ragged shapes: exercises the tiny 8-row pad (positions path) and the
    # in-kernel sequence mask (canonical 3-D path).
    B2, S2 = 3, 5
    k4, k5, k6 = jax.random.split(k3, 3)
    pos_r = jax.random.normal(k4, (B2, S2, J, 3), dtype=jnp.float32)
    pred_r = jax.random.uniform(k5, (B2, S2, J), dtype=jnp.float32)
    canon_r = jax.random.uniform(k6, (B2, J), dtype=jnp.float32)

    loss_r = jax.block_until_ready(loss_fn(pred_r, pos_r))
    bone_r = jnp.linalg.norm(pos_r - pos_r[:, :, safe, :], axis=-1) * mask
    ref_r = jnp.mean((pred_r - bone_r) ** 2)
    assert abs(float(loss_r) - float(ref_r)) < 1e-4 * max(1.0, abs(float(ref_r))), \
        (float(loss_r), float(ref_r))

    loss_r2 = jax.block_until_ready(
        loss_fn(pred_r, canon_r, target_is_canonical_lengths=True))
    ref_r2 = jnp.mean((pred_r - canon_r[:, None, :]) ** 2)
    assert abs(float(loss_r2) - float(ref_r2)) < 1e-5, (float(loss_r2), float(ref_r2))

    print("KERNEL_OK")
</pallas_src>

<mosaic_0001>
module attributes {stable_mosaic.version = 11 : i64} {
  func.func @_bone_pos_kernel(%arg0: i32, %arg1: memref<128x128xf32, #tpu.memory_space<vmem>>, %arg2: memref<3x2x128xf32, #tpu.memory_space<vmem>>, %arg3: memref<2x128xf32, #tpu.memory_space<vmem>>, %arg4: memref<1x8x128xf32, #tpu.memory_space<vmem>>) attributes {dimension_semantics = [#tpu.dimension_semantics<parallel>], iteration_bounds = array<i64: 1>, scalar_prefetch = 0 : i64, scratch_operands = 0 : i64, tpu.core_type = #tpu.core_type<tc>, window_params = [{pipeline_mode = #tpu.pipeline_mode<synchronous>, transform_indices = @transform_0, window_bounds = array<i64: 128, 128>}, {transform_indices = @transform_1, window_bounds = array<i64: 3, 2, 128>}, {transform_indices = @transform_2, window_bounds = array<i64: 2, 128>}, {transform_indices = @transform_3, window_bounds = array<i64: 1, 8, 128>}]} {
    %c0 = arith.constant 0 : index
    %c0_0 = arith.constant 0 : index
    %0 = vector.load %arg1[%c0, %c0_0] : memref<128x128xf32, #tpu.memory_space<vmem>>, vector<128x128xf32>
    %c0_1 = arith.constant 0 : index
    %c0_2 = arith.constant 0 : index
    %c0_3 = arith.constant 0 : index
    %1 = vector.load %arg2[%c0_1, %c0_2, %c0_3] : memref<3x2x128xf32, #tpu.memory_space<vmem>>, vector<1x2x128xf32>
    %2 = vector.shape_cast %1 : vector<1x2x128xf32> to vector<2x128xf32>
    %cst = arith.constant dense<0.000000e+00> : vector<2x128xf32>
    %3 = tpu.matmul %2, %0, %cst {dimension_numbers = #tpu.dot_dimension_numbers<[1], [0], [0], [1], [0, 0, 1, 1], [], []>} : vector<2x128xf32>, vector<128x128xf32>, vector<2x128xf32> -> vector<2x128xf32>
    %c1 = arith.constant 1 : index
    %c0_4 = arith.constant 0 : index
    %c0_5 = arith.constant 0 : index
    %4 = vector.load %arg2[%c1, %c0_4, %c0_5] : memref<3x2x128xf32, #tpu.memory_space<vmem>>, vector<1x2x128xf32>
    %5 = vector.shape_cast %4 : vector<1x2x128xf32> to vector<2x128xf32>
    %cst_6 = arith.constant dense<0.000000e+00> : vector<2x128xf32>
    %6 = tpu.matmul %5, %0, %cst_6 {dimension_numbers = #tpu.dot_dimension_numbers<[1], [0], [0], [1], [0, 0, 1, 1], [], []>} : vector<2x128xf32>, vector<128x128xf32>, vector<2x128xf32> -> vector<2x128xf32>
    %c2 = arith.constant 2 : index
    %c0_7 = arith.constant 0 : index
    %c0_8 = arith.constant 0 : index
    %7 = vector.load %arg2[%c2, %c0_7, %c0_8] : memref<3x2x128xf32, #tpu.memory_space<vmem>>, vector<1x2x128xf32>
    %8 = vector.shape_cast %7 : vector<1x2x128xf32> to vector<2x128xf32>
    %cst_9 = arith.constant dense<0.000000e+00> : vector<2x128xf32>
    %9 = tpu.matmul %8, %0, %cst_9 {dimension_numbers = #tpu.dot_dimension_numbers<[1], [0], [0], [1], [0, 0, 1, 1], [], []>} : vector<2x128xf32>, vector<128x128xf32>, vector<2x128xf32> -> vector<2x128xf32>
    %10 = arith.mulf %3, %3 : vector<2x128xf32>
    %11 = arith.mulf %6, %6 : vector<2x128xf32>
    %12 = arith.addf %10, %11 : vector<2x128xf32>
    %13 = arith.mulf %9, %9 : vector<2x128xf32>
    %14 = arith.addf %12, %13 : vector<2x128xf32>
    %c0_10 = arith.constant 0 : index
    %c0_11 = arith.constant 0 : index
    %15 = vector.load %arg3[%c0_10, %c0_11] : memref<2x128xf32, #tpu.memory_space<vmem>>, vector<2x128xf32>
    %16 = math.sqrt %14 : vector<2x128xf32>
    %17 = arith.subf %15, %16 : vector<2x128xf32>
    %18 = arith.mulf %17, %17 : vector<2x128xf32>
    %19 = vector.shape_cast %18 : vector<2x128xf32> to vector<1x2x128xf32>
    %cst_12 = arith.constant dense<0.000000e+00> : vector<1xf32>
    %20 = vector.multi_reduction <add>, %19, %cst_12 [1, 2] : vector<1x2x128xf32> to vector<1xf32>
    %21 = vector.shape_cast %20 : vector<1xf32> to vector<1x1x1xf32>
    %22 = vector.extract %21[0, 0, 0] : f32 from vector<1x1x1xf32>
    %23 = vector.broadcast %22 : f32 to vector<1x8x128xf32>
    %c0_13 = arith.constant 0 : index
    %c0_14 = arith.constant 0 : index
    %c0_15 = arith.constant 0 : index
    %24 = vector.load %arg4[%c0_13, %c0_14, %c0_15] : memref<1x8x128xf32, #tpu.memory_space<vmem>>, vector<1x8x128xf32>
    tpu.vector_store %arg4[%c0_13, %c0_14, %c0_15], %23 {strides = array<i32>} : memref<1x8x128xf32, #tpu.memory_space<vmem>>, vector<1x8x128xf32>,
    return
  }
  func.func @transform_0(%arg0: i32) -> (i32, i32) {
    %c0_i32 = arith.constant 0 : i32
    %c0_i32_0 = arith.constant 0 : i32
    %c0_i32_1 = arith.constant 0 : i32
    return %c0_i32, %c0_i32_0 : i32, i32
  }
  func.func @transform_1(%arg0: i32) -> (i32, i32, i32) {
    %c0_i32 = arith.constant 0 : i32
    %c0_i32_0 = arith.constant 0 : i32
    %c0_i32_1 = arith.constant 0 : i32
    return %c0_i32, %arg0, %c0_i32_0 : i32, i32, i32
  }
  func.func @transform_2(%arg0: i32) -> (i32, i32) {
    %c0_i32 = arith.constant 0 : i32
    %c0_i32_0 = arith.constant 0 : i32
    return %arg0, %c0_i32 : i32, i32
  }
  func.func @transform_3(%arg0: i32) -> (i32, i32, i32) {
    %c0_i32 = arith.constant 0 : i32
    %c0_i32_0 = arith.constant 0 : i32
    %c0_i32_1 = arith.constant 0 : i32
    return %arg0, %c0_i32, %c0_i32_0 : i32, i32, i32
  }
}

</mosaic_0001>

<llo_original>
// kernel: tpu_custom_call.1
$region0: #{tpu_custom_call.1}
  #allocation0 [shape = 'u32[]', space=smem, size = 0x4, offset = 0x4, fixed_abs, tag = 'smem constant byte address 0x4 - core index']
  #allocation1 [shape = 'u32[72,128]{1,0:T(1,128)}', space=vmem, size = 0x9000, scoped, tag = 'internal scratch']
  %s0 = inlined_call_operand.hbm [shape: f32[128,128], index: 0, kind: input, shape index: {}]
  %s1 = inlined_call_operand.hbm [shape: f32[3,2,128], index: 1, kind: input, shape index: {}]
  %s2 = inlined_call_operand.hbm [shape: f32[2,128], index: 2, kind: input, shape index: {}]
  %s3 = inlined_call_operand.hbm [shape: f32[1,8,128], index: 3, kind: output, shape index: {}]
  %s4 = sld [smem:[#allocation0]]
  $region34: #{tpu_custom_call.1} parent=0
    _
  %s6 = ssub.s32 1, %s4
  %s7 = scalar_select 0, %s6, %s4
  $region1: #{tpu_custom_call.1} parent=0
    #allocation2 [shape = 'u8[65536]{0}', space=vmem, size = 0x10000, scoped, tag = 'input window, operand 0, single buffered']
    #allocation3 [shape = 's32[1]{0}', space=sflag, size = 0x4, scoped, tag = 'scoped memory for tpu_custom_call.1']
    #allocation4 [shape = 's32[1]{0}', space=sflag, size = 0x4, scoped, tag = 'scoped memory for tpu_custom_call.1']
    #allocation5 [shape = 'u8[3072]{0}', space=vmem, size = 0xc00, scoped, tag = 'input window, operand 1, single buffered']
    #allocation6 [shape = 's32[1]{0}', space=sflag, size = 0x4, scoped, tag = 'scoped memory for tpu_custom_call.1']
    #allocation7 [shape = 'u8[1024]{0}', space=vmem, size = 0x400, scoped, tag = 'input window, operand 2, single buffered']
    #allocation8 [shape = 'u8[4096]{0}', space=vmem, size = 0x1000, scoped, tag = 'output window, operand 0, single buffered']
    %8 = vsyncpa [#allocation3], 0
    %9 = vsyncpa [#allocation6], 0
    %10 = vsyncpa [#allocation4], 0
    // Predicated region
    $region2: #{tpu_custom_call.1} parent=1 // pred_check
      _
    $region3: #{tpu_custom_call.1} parent=1 // pred_check_branch
      %12 = sbr.rel (0) target = $region5
    $region4: #{tpu_custom_call.1} parent=1 // pred_region
      %14 = vsyncadd [#allocation3], 0
      %s15 = sshll.u32 %s0, 4
      %s16 = int_to_ptr.hbm [resolvable:$true] %s15
      %s17 = sshll.u32 [#allocation2], 4
      %s18 = int_to_ptr.vmem [resolvable:$true] %s17
      %23 = dma.hbm_to_vmem [thread:$0]  %s16, 2048, %s18, [#allocation3], 128, 128, 8
    $region5: #{tpu_custom_call.1} parent=1 // pred_fallthru
      _
    // Predicated region
    $region6: #{tpu_custom_call.1} parent=1 // pred_check
      _
    $region7: #{tpu_custom_call.1} parent=1 // pred_check_branch
      %25 = sbr.rel (0) target = $region9
    $region8: #{tpu_custom_call.1} parent=1 // pred_region
      %27 = vsyncadd [#allocation6], 0
      %s28 = sshll.u32 %s1, 4
      %s29 = int_to_ptr.hbm [resolvable:$true] %s28
      %s30 = sshll.u32 [#allocation5], 4
      %s31 = int_to_ptr.vmem [resolvable:$true] %s30
      %36 = dma.hbm_to_vmem [thread:$0]  %s29, 96, %s31, [#allocation6], 32, 32, 2
    $region9: #{tpu_custom_call.1} parent=1 // pred_fallthru
      _
    // Predicated region
    $region10: #{tpu_custom_call.1} parent=1 // pred_check
      _
    $region11: #{tpu_custom_call.1} parent=1 // pred_check_branch
      %38 = sbr.rel (0) target = $region13
    $region12: #{tpu_custom_call.1} parent=1 // pred_region
      %40 = vsyncadd [#allocation6], 0
      %s42 = sshll.u32 %s2, 4
      %s43 = int_to_ptr.hbm [resolvable:$true] %s42
      %s44 = sshll.u32 [#allocation7], 4
      %s45 = int_to_ptr.vmem [resolvable:$true] %s44
      %47 = dma.hbm_to_vmem [thread:$0]  %s43, 32, %s45, [#allocation6]
    $region13: #{tpu_custom_call.1} parent=1 // pred_fallthru
      _
    // Predicated region
    $region14: #{tpu_custom_call.1} parent=1 // pred_check
      _
    $region15: #{tpu_custom_call.1} parent=1 // pred_check_branch
      %49 = sbr.rel (0) target = $region17
    $region16: #{tpu_custom_call.1} parent=1 // pred_region
      %51 = dma.done [#allocation3], 2048
    $region17: #{tpu_custom_call.1} parent=1 // pred_fallthru
      _
    // Predicated region
    $region18: #{tpu_custom_call.1} parent=1 // pred_check
      _
    $region19: #{tpu_custom_call.1} parent=1 // pred_check_branch
      %53 = sbr.rel (0) target = $region21
    $region20: #{tpu_custom_call.1} parent=1 // pred_region
      %55 = dma.done [#allocation6], 96
    $region21: #{tpu_custom_call.1} parent=1 // pred_fallthru
      _
    // Predicated region
    $region22: #{tpu_custom_call.1} parent=1 // pred_check
      _
    $region23: #{tpu_custom_call.1} parent=1 // pred_check_branch
      %57 = sbr.rel (0) target = $region25
    $region24: #{tpu_custom_call.1} parent=1 // pred_region
      %59 = dma.done [#allocation6], 32
    $region25: #{tpu_custom_call.1} parent=1 // pred_fallthru
      _
    %v60 = vld [vmem:[#allocation2] sm:$0xff]
    %v61 = vld [vmem:[#allocation2 + $0x8] sm:$0xff]
    %v62 = vld [vmem:[#allocation2 + $0x10] sm:$0xff]
    %v63 = vld [vmem:[#allocation2 + $0x18] sm:$0xff]
    %v64 = vld [vmem:[#allocation2 + $0x20] sm:$0xff]
    %v65 = vld [vmem:[#allocation2 + $0x28] sm:$0xff]
    %v66 = vld [vmem:[#allocation2 + $0x30] sm:$0xff]
    %v67 = vld [vmem:[#allocation2 + $0x38] sm:$0xff]
    %v68 = vld [vmem:[#allocation2 + $0x40] sm:$0xff]
    %v69 = vld [vmem:[#allocation2 + $0x48] sm:$0xff]
    %v70 = vld [vmem:[#allocation2 + $0x50] sm:$0xff]
    %v71 = vld [vmem:[#allocation2 + $0x58] sm:$0xff]
    %v72 = vld [vmem:[#allocation2 + $0x60] sm:$0xff]
    %v73 = vld [vmem:[#allocation2 + $0x68] sm:$0xff]
    %v74 = vld [vmem:[#allocation2 + $0x70] sm:$0xff]
    %v75 = vld [vmem:[#allocation2 + $0x78] sm:$0xff]
    %v76 = vld [vmem:[#allocation5] sm:$0x3]
    %77 = vmatpush.msra.mxu0 %v75
    %78 = vmatpush.msra.mxu0 %v74
    %79 = vmatpush.msra.mxu0 %v73
    %80 = vmatpush.msra.mxu0 %v72
    %81 = vmatpush.msra.mxu0 %v71
    %82 = vmatpush.msra.mxu0 %v70
    %83 = vmatpush.msra.mxu0 %v69
    %84 = vmatpush.msra.mxu0 %v68
    %85 = vmatpush.msra.mxu0 %v67
    %86 = vmatpush.msra.mxu0 %v66
    %87 = vmatpush.msra.mxu0 %v65
    %88 = vmatpush.msra.mxu0 %v64
    %89 = vmatpush.msra.mxu0 %v63
    %90 = vmatpush.msra.mxu0 %v62
    %91 = vmatpush.msra.mxu0 %v61
    %92 = vmatpush.msra.mxu0 %v60
    %93 = vmatmul.f32.gmra.mxu0 %v76
    %v94 = vpop.f32.mrf.mxu0
    %v95 = vadd.f32 0.0, %v94
    %96 = vdwg.mxu0
    %s97 = scalar_lea.vmem [#allocation5], 2
    %v98 = vld [vmem:[%s97] sm:$0x3]
    %99 = vmatpush.msra.mxu0 %v75
    %100 = vmatpush.msra.mxu0 %v74
    %101 = vmatpush.msra.mxu0 %v73
    %102 = vmatpush.msra.mxu0 %v72
    %103 = vmatpush.msra.mxu0 %v71
    %104 = vmatpush.msra.mxu0 %v70
    %105 = vmatpush.msra.mxu0 %v69
    %106 = vmatpush.msra.mxu0 %v68
    %107 = vmatpush.msra.mxu0 %v67
    %108 = vmatpush.msra.mxu0 %v66
    %109 = vmatpush.msra.mxu0 %v65
    %110 = vmatpush.msra.mxu0 %v64
    %111 = vmatpush.msra.mxu0 %v63
    %112 = vmatpush.msra.mxu0 %v62
    %113 = vmatpush.msra.mxu0 %v61
    %114 = vmatpush.msra.mxu0 %v60
    %115 = vmatmul.f32.gmra.mxu0 %v98
    %v116 = vpop.f32.mrf.mxu0
    %v117 = vadd.f32 0.0, %v116
    %118 = vdwg.mxu0
    %s119 = scalar_lea.vmem [#allocation5], 4
    %v120 = vld [vmem:[%s119] sm:$0x3]
    %121 = vmatpush.msra.mxu0 %v75
    %122 = vmatpush.msra.mxu0 %v74
    %123 = vmatpush.msra.mxu0 %v73
    %124 = vmatpush.msra.mxu0 %v72
    %125 = vmatpush.msra.mxu0 %v71
    %126 = vmatpush.msra.mxu0 %v70
    %127 = vmatpush.msra.mxu0 %v69
    %128 = vmatpush.msra.mxu0 %v68
    %129 = vmatpush.msra.mxu0 %v67
    %130 = vmatpush.msra.mxu0 %v66
    %131 = vmatpush.msra.mxu0 %v65
    %132 = vmatpush.msra.mxu0 %v64
    %133 = vmatpush.msra.mxu0 %v63
    %134 = vmatpush.msra.mxu0 %v62
    %135 = vmatpush.msra.mxu0 %v61
    %136 = vmatpush.msra.mxu0 %v60
    %137 = vmatmul.f32.gmra.mxu0 %v120
    %v138 = vpop.f32.mrf.mxu0
    %v139 = vadd.f32 0.0, %v138
    %140 = vdwg.mxu0
    %v141 = vmul.f32 %v95, %v95
    %v142 = vmul.f32 %v117, %v117
    %v143 = vadd.f32 %v141, %v142
    %v144 = vmul.f32 %v139, %v139
    %v145 = vadd.f32 %v143, %v144
    %v146 = vld [vmem:[#allocation7] sm:$0x3]
    %v147 = vrsqrt.pop %v145
    %v148 = vmul.f32 %v147, %v145
    %v149 = vmul.f32 %v148, %v147
    %v150 = vmul.f32 0.5, %v149
    %v151 = vsub.f32 1.5, %v150
    %v152 = vmul.f32 %v147, %v151
    %v153 = vmul.f32 %v145, %v152
    %vm154 = vcmp.eq.f32.partialorder %v145, inf
    %v155 = vsel %vm154, %v145, %v153
    %vm156 = vcmp.eq.f32.partialorder %v145, 0.0
    %v157 = vand.u32 %v145, 2147483648
    %v158 = vsel %vm156, %v157, %v155
    %v159 = vsub.f32 %v146, %v158
    %v160 = vmul.f32 %v159, %v159
    %vm161 = vcmask 1041408
    %v162 = vsel %vm161, %v160, 0.0
    %163 = vadd.xlane.f32.xlu0 %v162
    %v164 = vpop.xlane.xlu0 %163
    %v165 = vrot.slane %v164, 4
    %v166 = vadd.f32 %v164, %v165
    %v167 = vrot.slane %v166, 2
    %v168 = vadd.f32 %v166, %v167
    %v169 = vrot.slane %v168, 1
    %v170 = vadd.f32 %v168, %v169
    %s171 = vtos %v170
    %v172 = vstv %s171
    %173 = vst [vmem:[#allocation8] sm:$0xff] %v172
    // Predicated region
    $region26: #{tpu_custom_call.1} parent=1 // pred_check
      _
    $region27: #{tpu_custom_call.1} parent=1 // pred_check_branch
      %175 = sbr.rel (0) target = $region29
    $region28: #{tpu_custom_call.1} parent=1 // pred_region
      %177 = vsyncadd [#allocation4], 0
      %s179 = sshll.u32 [#allocation8], 4
      %s180 = int_to_ptr.vmem [resolvable:$true] %s179
      %s181 = sshll.u32 %s3, 4
      %s182 = int_to_ptr.hbm [resolvable:$true] %s181
      %184 = dma.vmem_to_hbm [thread:$0]  %s180, 128, %s182, [#allocation4]
    $region29: #{tpu_custom_call.1} parent=1 // pred_fallthru
      _
    // Predicated region
    $region30: #{tpu_custom_call.1} parent=1 // pred_check
      _
    $region31: #{tpu_custom_call.1} parent=1 // pred_check_branch
      %186 = sbr.rel (0) target = $region33
    $region32: #{tpu_custom_call.1} parent=1 // pred_region
      %188 = dma.done [#allocation4], 128
    $region33: #{tpu_custom_call.1} parent=1 // pred_fallthru
      _
    %189 = vsyncpa [#allocation3], 1
    %190 = vsyncpa [#allocation6], 1
    %191 = vsyncpa [#allocation4], 1

</llo_original>
